<compile_context>
chip_gen: v7x
topology: tpu7x:2x2x1
jax: 0.10.0
libtpu: 0.0.40
codegen_flags: <defaults>
</compile_context>

<pallas_src>
import functools

import jax
import jax.numpy as jnp
from jax.experimental import pallas as pl
from jax.experimental.pallas import tpu as pltpu


def _round_up(n, m):
    return (n + m - 1) // m * m


def _cdiv(a, b):
    return -(-a // b)


def _chip_traits():
    """(mxu_row_granule, want_two_grid_steps, vmem_cap_bytes) for the local TPU."""
    kind = ""
    try:
        kind = jax.devices()[0].device_kind.lower()
    except Exception:
        pass
    is_v5e = ("v5 lite" in kind) or ("v5e" in kind) or ("v5lite" in kind)
    is_v7 = ("v7" in kind) or ("tpu7" in kind)
    mxu_rows = 128 if is_v5e else 256          # v5e: 4x128^2 MXU; v6e/v7x: 2x256^2
    want_two_steps = is_v7                     # v7x: 2 TensorCores/chip -> grid >= 2
    vmem_cap = (40 if is_v7 else 96) * 1024 * 1024   # v7x: 64 MiB physical per TC
    return mxu_rows, want_two_steps, vmem_cap


def _choose_batch_tile(B, mxu_rows, want_two_steps):
    """Pick the step count first (padding <= ~one granule), then the tile size."""
    target = 512
    n_steps = max(1, _cdiv(B, target))
    if want_two_steps:
        n_steps = max(n_steps, min(2, _cdiv(B, 8)))  # feed both v7x TensorCores
    tile8 = _round_up(_cdiv(B, n_steps), 8)
    tile_mxu = _round_up(tile8, mxu_rows)
    # Adopt the MXU row granule only if it inflates the padded batch by <= ~12.5%.
    if n_steps * tile_mxu <= _round_up(B + max(B // 8, 8), 8):
        return tile_mxu
    return tile8


def _classifier_kernel(x_ref, w1_ref, w2_ref, w3_ref, w4_ref, b_ref,
                       logits_ref, attn_ref, *, Hp, Dp, Cp):
    wdt = w1_ref.dtype                          # bf16 (or f32) MXU input dtype

    # Static, lane-aligned (128-multiple) slices of the coalesced bias row: free.
    b1 = b_ref[:, 0:Hp]
    b2 = b_ref[:, Hp:Hp + Dp]
    b3 = b_ref[:, Hp + Dp:Hp + Dp + Hp]
    b4 = b_ref[:, Hp + Dp + Hp:Hp + Dp + Hp + Cp]

    x_in = x_ref[...]                           # (TB, Dp), f32 or bf16
    x32 = x_in.astype(jnp.float32)

    # --- attention branch: Linear -> tanh -> Linear -> sigmoid ---
    h1 = jnp.tanh(
        jnp.dot(x_in.astype(wdt), w1_ref[...],
                preferred_element_type=jnp.float32) + b1)            # (TB, Hp)
    attn = jax.nn.sigmoid(
        jnp.dot(h1.astype(wdt), w2_ref[...],
                preferred_element_type=jnp.float32) + b2)            # (TB, Dp)

    # --- reweight input (f32 multiply) ---
    x_w = x32 * attn                                                 # (TB, Dp)

    # --- classifier branch: Linear -> relu -> Linear ---
    h2 = jnp.maximum(
        jnp.dot(x_w.astype(wdt), w3_ref[...],
                preferred_element_type=jnp.float32) + b3, 0.0)       # (TB, Hp)
    logits = (jnp.dot(h2.astype(wdt), w4_ref[...],
                      preferred_element_type=jnp.float32) + b4)      # (TB, Cp)

    logits_ref[...] = logits.astype(logits_ref.dtype)
    attn_ref[...] = attn.astype(attn_ref.dtype)


def prepare_params(params, weight_dtype=jnp.bfloat16):
    """Pad weights/biases once to lane-friendly (128-multiple) shapes, cast
    weights to the MXU input dtype, and coalesce the four biases into one row.
    Zero padding keeps the math exact."""
    D, H = params["w1"].shape
    C = params["w4"].shape[1]
    Dp, Hp, Cp = _round_up(D, 128), _round_up(H, 128), _round_up(C, 128)

    def pad2(a, r, c):
        return jnp.pad(a, ((0, r - a.shape[0]), (0, c - a.shape[1])))

    b_all = jnp.concatenate([
        pad2(params["b1"], 1, Hp), pad2(params["b2"], 1, Dp),
        pad2(params["b3"], 1, Hp), pad2(params["b4"], 1, Cp)], axis=1,
    ).astype(jnp.float32)                               # (1, Hp+Dp+Hp+Cp), one DMA

    prepared = dict(
        w1=pad2(params["w1"], Dp, Hp).astype(weight_dtype),
        w2=pad2(params["w2"], Hp, Dp).astype(weight_dtype),
        w3=pad2(params["w3"], Dp, Hp).astype(weight_dtype),
        w4=pad2(params["w4"], Hp, Cp).astype(weight_dtype),
        b_all=b_all,
    )
    dims = dict(D=D, H=H, C=C, Dp=Dp, Hp=Hp, Cp=Cp)
    return prepared, dims


def multiclass_classifier_forward(x, prepared_params, dims, *,
                                  batch_tile=None, io_bf16=False):
    """x: (B, D) float32.  prepared_params/dims: output of prepare_params.
    io_bf16=True reads x and writes attn_weights in bf16 (HBM-traffic saver)."""
    B, D = x.shape
    assert D == dims["D"]
    Dp, Hp, Cp = dims["Dp"], dims["Hp"], dims["Cp"]
    p = prepared_params

    mxu_rows, want_two_steps, vmem_cap = _chip_traits()
    if batch_tile is None:
        batch_tile = _choose_batch_tile(B, mxu_rows, want_two_steps)
    batch_tile = _round_up(batch_tile, 8)
    Bp = _round_up(B, batch_tile)
    steps = Bp // batch_tile

    x_dtype = jnp.bfloat16 if io_bf16 else jnp.float32
    attn_dtype = jnp.bfloat16 if io_bf16 else jnp.float32
    xp = x.astype(x_dtype)
    if (Bp, Dp) != (B, D):
        xp = jnp.pad(xp, ((0, Bp - B), (0, Dp - D)))

    weight_bytes = sum(int(v.size) * v.dtype.itemsize for v in p.values())
    if weight_bytes > vmem_cap // 2:
        # TODO(synk): at production D/H, switch to a K-axis "arbitrary"
        # reduction grid (tiled w1..w4 + f32 VMEM accumulator, P3 pattern)
        # instead of holding all weights resident in VMEM.
        raise ValueError("weights too large for the weights-resident kernel; "
                         "the tiled-reduction path is required at this size")

    # VMEM budget from the actual footprint: weights single-buffered, x tile
    # multi-buffered, outputs double-buffered, plus f32 body intermediates.
    x_buf = 1 if steps == 1 else min(3, steps)
    x_bytes = batch_tile * Dp * jnp.dtype(x_dtype).itemsize * x_buf
    out_bytes = 2 * batch_tile * (Cp * 4 + Dp * jnp.dtype(attn_dtype).itemsize)
    body_bytes = batch_tile * (2 * Hp + 2 * Dp + Cp) * 4
    vmem_bytes = int(1.5 * (weight_bytes + x_bytes + out_bytes + body_bytes)) + (4 << 20)
    vmem_bytes = min(max(vmem_bytes, 16 << 20), vmem_cap)

    flops = 2 * Bp * (Dp * Hp + Hp * Dp + Dp * Hp + Hp * Cp)
    transcendentals = Bp * (Hp + Dp)                    # tanh + sigmoid
    bytes_accessed = (Bp * Dp * jnp.dtype(x_dtype).itemsize
                      + Bp * Cp * 4
                      + Bp * Dp * jnp.dtype(attn_dtype).itemsize
                      + weight_bytes)

    # Resident params: constant block index -> fetched once; single-buffered so
    # the default double-buffer allocation is not wasted (key on v7x's 64 MiB).
    def rep(shape):
        return pl.BlockSpec(shape, lambda i: (0, 0), pipeline_mode=pl.Buffered(1))

    x_spec = pl.BlockSpec((batch_tile, Dp), lambda i: (i, 0),
                          pipeline_mode=pl.Buffered(x_buf))

    kernel = functools.partial(_classifier_kernel, Hp=Hp, Dp=Dp, Cp=Cp)

    logits_p, attn_p = pl.pallas_call(
        kernel,
        out_shape=(
            jax.ShapeDtypeStruct((Bp, Cp), jnp.float32),    # padded logits
            jax.ShapeDtypeStruct((Bp, Dp), attn_dtype),     # padded attn_weights
        ),
        grid_spec=pltpu.PrefetchScalarGridSpec(
            num_scalar_prefetch=0,
            grid=(steps,),
            in_specs=[
                x_spec,                                     # x
                rep((Dp, Hp)), rep((Hp, Dp)),               # attn Linear 1 / 2
                rep((Dp, Hp)), rep((Hp, Cp)),               # clf  Linear 1 / 2
                rep((1, Hp + Dp + Hp + Cp)),                # coalesced biases
            ],
            out_specs=[
                pl.BlockSpec((batch_tile, Cp), lambda i: (i, 0)),
                pl.BlockSpec((batch_tile, Dp), lambda i: (i, 0)),
            ],
        ),
        compiler_params=pltpu.CompilerParams(
            dimension_semantics=("parallel",),
            vmem_limit_bytes=vmem_bytes),
        cost_estimate=pl.CostEstimate(
            flops=flops,
            transcendentals=transcendentals,
            bytes_accessed=bytes_accessed),
    )(xp, p["w1"], p["w2"], p["w3"], p["w4"], p["b_all"])

    # Slice padded outputs back to the logical shapes.
    return logits_p[:B, :dims["C"]], attn_p[:B, :D]


def init_params(key, input_dim, hidden_dim, num_classes):
    """Deterministic synthetic init (matches nn.Linear shapes, stored (in,out))."""
    ks = jax.random.split(key, 8)

    def lin(kw, kb, fan_in, fan_out):
        bound = 1.0 / jnp.sqrt(fan_in)
        w = jax.random.uniform(kw, (fan_in, fan_out), jnp.float32, -bound, bound)
        b = jax.random.uniform(kb, (1, fan_out), jnp.float32, -bound, bound)
        return w, b

    w1, b1 = lin(ks[0], ks[1], input_dim, hidden_dim)    # attn[0]
    w2, b2 = lin(ks[2], ks[3], hidden_dim, input_dim)    # attn[2]
    w3, b3 = lin(ks[4], ks[5], input_dim, hidden_dim)    # classifier[0]
    w4, b4 = lin(ks[6], ks[7], hidden_dim, num_classes)  # classifier[2]
    return dict(w1=w1, b1=b1, w2=w2, b2=b2, w3=w3, b3=b3, w4=w4, b4=b4)


def _reference(x, params, weight_dtype=jnp.bfloat16):
    """Pure-JAX reference with the same bf16-weight / f32-accumulate recipe."""
    def d(a, w):
        return jnp.dot(a.astype(weight_dtype), w.astype(weight_dtype),
                       preferred_element_type=jnp.float32)
    h1 = jnp.tanh(d(x, params["w1"]) + params["b1"])
    attn = jax.nn.sigmoid(d(h1, params["w2"]) + params["b2"])
    xw = x * attn
    h2 = jnp.maximum(d(xw, params["w3"]) + params["b3"], 0.0)
    logits = d(h2, params["w4"]) + params["b4"]
    return logits, attn


if __name__ == "__main__":
    key = jax.random.PRNGKey(0)
    k_x, k_p = jax.random.split(key)

    # Small shapes consistent with the module (hidden_dim scaled down, C=3).
    B, D, H, C = 50, 32, 64, 3
    x = jax.random.normal(k_x, (B, D), jnp.float32)
    params = init_params(k_p, D, H, C)
    prepared, dims = prepare_params(params, weight_dtype=jnp.bfloat16)

    # --- default tiling (single step on v5e/v6e; >=2 steps / both TCs on v7x) ---
    logits, attn = multiclass_classifier_forward(x, prepared, dims)
    jax.block_until_ready((logits, attn))
    ref_logits, ref_attn = _reference(x, params)
    assert logits.shape == (B, C) and attn.shape == (B, D)
    assert jnp.allclose(logits, ref_logits, atol=1e-2, rtol=1e-2)
    assert jnp.allclose(attn, ref_attn, atol=1e-2, rtol=1e-2)

    # --- multi-step grid path (exercises the pipelined batch loop, Buffered x) ---
    B2 = 96
    x2 = jax.random.normal(jax.random.PRNGKey(1), (B2, D), jnp.float32)
    logits2, attn2 = multiclass_classifier_forward(x2, prepared, dims,
                                                   batch_tile=32)
    jax.block_until_ready((logits2, attn2))
    ref_logits2, ref_attn2 = _reference(x2, params)
    assert jnp.allclose(logits2, ref_logits2, atol=1e-2, rtol=1e-2)
    assert jnp.allclose(attn2, ref_attn2, atol=1e-2, rtol=1e-2)

    # --- bf16 I/O path (halves the dominant x-read / attn-write HBM streams) ---
    logits3, attn3 = multiclass_classifier_forward(x2, prepared, dims,
                                                   batch_tile=32, io_bf16=True)
    jax.block_until_ready((logits3, attn3))
    x2_bf = x2.astype(jnp.bfloat16).astype(jnp.float32)
    ref_logits3, ref_attn3 = _reference(x2_bf, params)
    assert attn3.dtype == jnp.bfloat16
    assert jnp.allclose(logits3, ref_logits3, atol=2e-2, rtol=2e-2)
    assert jnp.allclose(attn3.astype(jnp.float32),
                        ref_attn3.astype(jnp.bfloat16).astype(jnp.float32),
                        atol=2e-2, rtol=2e-2)

    print("KERNEL_OK")
</pallas_src>

<mosaic_0001>
module attributes {stable_mosaic.version = 11 : i64} {
  func.func @_classifier_kernel(%arg0: i32, %arg1: memref<56x128xf32, #tpu.memory_space<vmem>>, %arg2: memref<128x128xbf16, #tpu.memory_space<vmem>>, %arg3: memref<128x128xbf16, #tpu.memory_space<vmem>>, %arg4: memref<128x128xbf16, #tpu.memory_space<vmem>>, %arg5: memref<128x128xbf16, #tpu.memory_space<vmem>>, %arg6: memref<1x512xf32, #tpu.memory_space<vmem>>, %arg7: memref<56x128xf32, #tpu.memory_space<vmem>>, %arg8: memref<56x128xf32, #tpu.memory_space<vmem>>) attributes {dimension_semantics = [#tpu.dimension_semantics<parallel>], iteration_bounds = array<i64: 1>, scalar_prefetch = 0 : i64, scratch_operands = 0 : i64, tpu.core_type = #tpu.core_type<tc>, window_params = [{pipeline_mode = #tpu.pipeline_mode<synchronous>, transform_indices = @transform_0, window_bounds = array<i64: 56, 128>}, {pipeline_mode = #tpu.pipeline_mode<synchronous>, transform_indices = @transform_1, window_bounds = array<i64: 128, 128>}, {pipeline_mode = #tpu.pipeline_mode<synchronous>, transform_indices = @transform_2, window_bounds = array<i64: 128, 128>}, {pipeline_mode = #tpu.pipeline_mode<synchronous>, transform_indices = @transform_3, window_bounds = array<i64: 128, 128>}, {pipeline_mode = #tpu.pipeline_mode<synchronous>, transform_indices = @transform_4, window_bounds = array<i64: 128, 128>}, {pipeline_mode = #tpu.pipeline_mode<synchronous>, transform_indices = @transform_5, window_bounds = array<i64: 1, 512>}, {transform_indices = @transform_6, window_bounds = array<i64: 56, 128>}, {transform_indices = @transform_7, window_bounds = array<i64: 56, 128>}]} {
    %c0 = arith.constant 0 : index
    %c0_0 = arith.constant 0 : index
    %0 = vector.load %arg6[%c0, %c0_0] : memref<1x512xf32, #tpu.memory_space<vmem>>, vector<1x128xf32>
    %c0_1 = arith.constant 0 : index
    %c128 = arith.constant 128 : index
    %1 = vector.load %arg6[%c0_1, %c128] : memref<1x512xf32, #tpu.memory_space<vmem>>, vector<1x128xf32>
    %c0_2 = arith.constant 0 : index
    %c256 = arith.constant 256 : index
    %2 = vector.load %arg6[%c0_2, %c256] : memref<1x512xf32, #tpu.memory_space<vmem>>, vector<1x128xf32>
    %c0_3 = arith.constant 0 : index
    %c384 = arith.constant 384 : index
    %3 = vector.load %arg6[%c0_3, %c384] : memref<1x512xf32, #tpu.memory_space<vmem>>, vector<1x128xf32>
    %c0_4 = arith.constant 0 : index
    %c0_5 = arith.constant 0 : index
    %4 = vector.load %arg1[%c0_4, %c0_5] : memref<56x128xf32, #tpu.memory_space<vmem>>, vector<56x128xf32>
    %5 = arith.truncf %4 : vector<56x128xf32> to vector<56x128xbf16>
    %c0_6 = arith.constant 0 : index
    %c0_7 = arith.constant 0 : index
    %6 = vector.load %arg2[%c0_6, %c0_7] : memref<128x128xbf16, #tpu.memory_space<vmem>>, vector<128x128xbf16>
    %cst = arith.constant dense<0.000000e+00> : vector<56x128xf32>
    %7 = tpu.matmul %5, %6, %cst {dimension_numbers = #tpu.dot_dimension_numbers<[1], [0], [0], [1], [0, 0, 1, 1], [], []>} : vector<56x128xbf16>, vector<128x128xbf16>, vector<56x128xf32> -> vector<56x128xf32>
    %8 = vector.broadcast %0 : vector<1x128xf32> to vector<56x128xf32>
    %9 = arith.addf %7, %8 : vector<56x128xf32>
    %10 = math.tanh %9 : vector<56x128xf32>
    %11 = arith.truncf %10 : vector<56x128xf32> to vector<56x128xbf16>
    %c0_8 = arith.constant 0 : index
    %c0_9 = arith.constant 0 : index
    %12 = vector.load %arg3[%c0_8, %c0_9] : memref<128x128xbf16, #tpu.memory_space<vmem>>, vector<128x128xbf16>
    %cst_10 = arith.constant dense<0.000000e+00> : vector<56x128xf32>
    %13 = tpu.matmul %11, %12, %cst_10 {dimension_numbers = #tpu.dot_dimension_numbers<[1], [0], [0], [1], [0, 0, 1, 1], [], []>} : vector<56x128xbf16>, vector<128x128xbf16>, vector<56x128xf32> -> vector<56x128xf32>
    %14 = vector.broadcast %1 : vector<1x128xf32> to vector<56x128xf32>
    %15 = arith.addf %13, %14 : vector<56x128xf32>
    %16 = arith.negf %15 : vector<56x128xf32>
    %17 = math.exp %16 : vector<56x128xf32>
    %cst_11 = arith.constant 1.000000e+00 : f32
    %18 = vector.broadcast %cst_11 : f32 to vector<56x128xf32>
    %19 = arith.addf %18, %17 : vector<56x128xf32>
    %20 = arith.divf %18, %19 : vector<56x128xf32>
    %21 = arith.mulf %4, %20 : vector<56x128xf32>
    %22 = arith.truncf %21 : vector<56x128xf32> to vector<56x128xbf16>
    %c0_12 = arith.constant 0 : index
    %c0_13 = arith.constant 0 : index
    %23 = vector.load %arg4[%c0_12, %c0_13] : memref<128x128xbf16, #tpu.memory_space<vmem>>, vector<128x128xbf16>
    %cst_14 = arith.constant dense<0.000000e+00> : vector<56x128xf32>
    %24 = tpu.matmul %22, %23, %cst_14 {dimension_numbers = #tpu.dot_dimension_numbers<[1], [0], [0], [1], [0, 0, 1, 1], [], []>} : vector<56x128xbf16>, vector<128x128xbf16>, vector<56x128xf32> -> vector<56x128xf32>
    %25 = vector.broadcast %2 : vector<1x128xf32> to vector<56x128xf32>
    %26 = arith.addf %24, %25 : vector<56x128xf32>
    %cst_15 = arith.constant 0.000000e+00 : f32
    %27 = vector.broadcast %cst_15 : f32 to vector<56x128xf32>
    %28 = arith.maximumf %26, %27 : vector<56x128xf32>
    %29 = arith.truncf %28 : vector<56x128xf32> to vector<56x128xbf16>
    %c0_16 = arith.constant 0 : index
    %c0_17 = arith.constant 0 : index
    %30 = vector.load %arg5[%c0_16, %c0_17] : memref<128x128xbf16, #tpu.memory_space<vmem>>, vector<128x128xbf16>
    %cst_18 = arith.constant dense<0.000000e+00> : vector<56x128xf32>
    %31 = tpu.matmul %29, %30, %cst_18 {dimension_numbers = #tpu.dot_dimension_numbers<[1], [0], [0], [1], [0, 0, 1, 1], [], []>} : vector<56x128xbf16>, vector<128x128xbf16>, vector<56x128xf32> -> vector<56x128xf32>
    %32 = vector.broadcast %3 : vector<1x128xf32> to vector<56x128xf32>
    %33 = arith.addf %31, %32 : vector<56x128xf32>
    %c0_19 = arith.constant 0 : index
    %c0_20 = arith.constant 0 : index
    %34 = vector.load %arg7[%c0_19, %c0_20] : memref<56x128xf32, #tpu.memory_space<vmem>>, vector<56x128xf32>
    tpu.vector_store %arg7[%c0_19, %c0_20], %33 {strides = array<i32>} : memref<56x128xf32, #tpu.memory_space<vmem>>, vector<56x128xf32>,
    %c0_21 = arith.constant 0 : index
    %c0_22 = arith.constant 0 : index
    %35 = vector.load %arg8[%c0_21, %c0_22] : memref<56x128xf32, #tpu.memory_space<vmem>>, vector<56x128xf32>
    tpu.vector_store %arg8[%c0_21, %c0_22], %20 {strides = array<i32>} : memref<56x128xf32, #tpu.memory_space<vmem>>, vector<56x128xf32>,
    return
  }
  func.func @transform_0(%arg0: i32) -> (i32, i32) {
    %c0_i32 = arith.constant 0 : i32
    %c0_i32_0 = arith.constant 0 : i32
    return %arg0, %c0_i32 : i32, i32
  }
  func.func @transform_1(%arg0: i32) -> (i32, i32) {
    %c0_i32 = arith.constant 0 : i32
    %c0_i32_0 = arith.constant 0 : i32
    %c0_i32_1 = arith.constant 0 : i32
    return %c0_i32, %c0_i32_0 : i32, i32
  }
  func.func @transform_2(%arg0: i32) -> (i32, i32) {
    %c0_i32 = arith.constant 0 : i32
    %c0_i32_0 = arith.constant 0 : i32
    %c0_i32_1 = arith.constant 0 : i32
    return %c0_i32, %c0_i32_0 : i32, i32
  }
  func.func @transform_3(%arg0: i32) -> (i32, i32) {
    %c0_i32 = arith.constant 0 : i32
    %c0_i32_0 = arith.constant 0 : i32
    %c0_i32_1 = arith.constant 0 : i32
    return %c0_i32, %c0_i32_0 : i32, i32
  }
  func.func @transform_4(%arg0: i32) -> (i32, i32) {
    %c0_i32 = arith.constant 0 : i32
    %c0_i32_0 = arith.constant 0 : i32
    %c0_i32_1 = arith.constant 0 : i32
    return %c0_i32, %c0_i32_0 : i32, i32
  }
  func.func @transform_5(%arg0: i32) -> (i32, i32) {
    %c0_i32 = arith.constant 0 : i32
    %c0_i32_0 = arith.constant 0 : i32
    %c0_i32_1 = arith.constant 0 : i32
    return %c0_i32, %c0_i32_0 : i32, i32
  }
  func.func @transform_6(%arg0: i32) -> (i32, i32) {
    %c0_i32 = arith.constant 0 : i32
    %c0_i32_0 = arith.constant 0 : i32
    return %arg0, %c0_i32 : i32, i32
  }
  func.func @transform_7(%arg0: i32) -> (i32, i32) {
    %c0_i32 = arith.constant 0 : i32
    %c0_i32_0 = arith.constant 0 : i32
    return %arg0, %c0_i32 : i32, i32
  }
}

</mosaic_0001>

<llo_original>
// kernel: tpu_custom_call.1
$region0: #{tpu_custom_call.1}
  #allocation0 [shape = 'u32[]', space=smem, size = 0x4, offset = 0x4, fixed_abs, tag = 'smem constant byte address 0x4 - core index']
  #allocation1 [shape = 'u32[144,128]{1,0:T(1,128)}', space=vmem, size = 0x12000, scoped, tag = 'internal scratch']
  %s0 = inlined_call_operand.hbm [shape: f32[56,128], index: 0, kind: input, shape index: {}]
  %s1 = inlined_call_operand.hbm [shape: bf16[128,128], index: 1, kind: input, shape index: {}]
  %s2 = inlined_call_operand.hbm [shape: bf16[128,128], index: 2, kind: input, shape index: {}]
  %s3 = inlined_call_operand.hbm [shape: bf16[128,128], index: 3, kind: input, shape index: {}]
  %s4 = inlined_call_operand.hbm [shape: bf16[128,128], index: 4, kind: input, shape index: {}]
  %s5 = inlined_call_operand.vmem [shape: f32[1,512], index: 5, kind: input, shape index: {}]
  %s6 = inlined_call_operand.hbm [shape: f32[56,128], index: 6, kind: output, shape index: {0}]
  %s7 = inlined_call_operand.hbm [shape: f32[56,128], index: 7, kind: output, shape index: {1}]
  %8 = xla_tuple %s6, %s7
  %s9 = sld [smem:[#allocation0]]
  $region62: #{tpu_custom_call.1} parent=0
    _
  %s11 = ssub.s32 1, %s9
  %s12 = scalar_select 0, %s11, %s9
  $region1: #{tpu_custom_call.1} parent=0
    #allocation2 [shape = 'u8[28672]{0}', space=vmem, size = 0x7000, scoped, tag = 'input window, operand 0, single buffered']
    #allocation3 [shape = 's32[1]{0}', space=sflag, size = 0x4, scoped, tag = 'scoped memory for tpu_custom_call.1']
    #allocation4 [shape = 's32[1]{0}', space=sflag, size = 0x4, scoped, tag = 'scoped memory for tpu_custom_call.1']
    #allocation5 [shape = 'u8[32768]{0}', space=vmem, size = 0x8000, scoped, tag = 'input window, operand 1, single buffered']
    #allocation6 [shape = 's32[1]{0}', space=sflag, size = 0x4, scoped, tag = 'scoped memory for tpu_custom_call.1']
    #allocation7 [shape = 'u8[32768]{0}', space=vmem, size = 0x8000, scoped, tag = 'input window, operand 2, single buffered']
    #allocation8 [shape = 'u8[32768]{0}', space=vmem, size = 0x8000, scoped, tag = 'input window, operand 3, single buffered']
    #allocation9 [shape = 's32[1]{0}', space=sflag, size = 0x4, scoped, tag = 'scoped memory for tpu_custom_call.1']
    #allocation10 [shape = 'u8[32768]{0}', space=vmem, size = 0x8000, scoped, tag = 'input window, operand 4, single buffered']
    #allocation11 [shape = 'u8[28672]{0}', space=vmem, size = 0x7000, scoped, tag = 'output window, operand 0, single buffered']
    #allocation12 [shape = 'u8[28672]{0}', space=vmem, size = 0x7000, scoped, tag = 'output window, operand 1, single buffered']
    #allocation13 [shape = 's32[1]{0}', space=sflag, size = 0x4, scoped, tag = 'scoped memory for tpu_custom_call.1']
    %13 = vsyncpa [#allocation3], 0
    %14 = vsyncpa [#allocation6], 0
    %15 = vsyncpa [#allocation9], 0
    %16 = vsyncpa [#allocation4], 0
    %17 = vsyncpa [#allocation13], 0
    // Predicated region
    $region2: #{tpu_custom_call.1} parent=1 // pred_check
      _
    $region3: #{tpu_custom_call.1} parent=1 // pred_check_branch
      %19 = sbr.rel (0) target = $region5
    $region4: #{tpu_custom_call.1} parent=1 // pred_region
      %s21 = ssub.s32 896, 896
      %22 = vsyncadd [#allocation3], %s21
      %s23 = sshll.u32 [#allocation2], 4
      %s24 = int_to_ptr.vmem [resolvable:$true] %s23
      %29 = dma.hbm_to_vmem [thread:$0]  %s0, 896, %s24, [#allocation3], 128, 128, 8
    $region5: #{tpu_custom_call.1} parent=1 // pred_fallthru
      _
    // Predicated region
    $region6: #{tpu_custom_call.1} parent=1 // pred_check
      _
    $region7: #{tpu_custom_call.1} parent=1 // pred_check_branch
      %31 = sbr.rel (0) target = $region9
    $region8: #{tpu_custom_call.1} parent=1 // pred_region
      %s33 = ssub.s32 1024, 1024
      %34 = vsyncadd [#allocation6], %s33
      %s35 = sshll.u32 [#allocation5], 4
      %s36 = int_to_ptr.vmem [resolvable:$true] %s35
      %41 = dma.hbm_to_vmem [thread:$0]  %s1, 1024, %s36, [#allocation6], 64, 64, 4
    $region9: #{tpu_custom_call.1} parent=1 // pred_fallthru
      _
    // Predicated region
    $region10: #{tpu_custom_call.1} parent=1 // pred_check
      _
    $region11: #{tpu_custom_call.1} parent=1 // pred_check_branch
      %43 = sbr.rel (0) target = $region13
    $region12: #{tpu_custom_call.1} parent=1 // pred_region
      %s45 = ssub.s32 1024, 1024
      %46 = vsyncadd [#allocation6], %s45
      %s47 = sshll.u32 [#allocation7], 4
      %s48 = int_to_ptr.vmem [resolvable:$true] %s47
      %53 = dma.hbm_to_vmem [thread:$0]  %s2, 1024, %s48, [#allocation6], 64, 64, 4
    $region13: #{tpu_custom_call.1} parent=1 // pred_fallthru
      _
    // Predicated region
    $region14: #{tpu_custom_call.1} parent=1 // pred_check
      _
    $region15: #{tpu_custom_call.1} parent=1 // pred_check_branch
      %55 = sbr.rel (0) target = $region17
    $region16: #{tpu_custom_call.1} parent=1 // pred_region
      %s57 = ssub.s32 1024, 1024
      %58 = vsyncadd [#allocation9], %s57
      %s59 = sshll.u32 [#allocation8], 4
      %s60 = int_to_ptr.vmem [resolvable:$true] %s59
      %65 = dma.hbm_to_vmem [thread:$0]  %s3, 1024, %s60, [#allocation9], 64, 64, 4
    $region17: #{tpu_custom_call.1} parent=1 // pred_fallthru
      _
    // Predicated region
    $region18: #{tpu_custom_call.1} parent=1 // pred_check
      _
    $region19: #{tpu_custom_call.1} parent=1 // pred_check_branch
      %67 = sbr.rel (0) target = $region21
    $region20: #{tpu_custom_call.1} parent=1 // pred_region
      %s69 = ssub.s32 1024, 1024
      %70 = vsyncadd [#allocation9], %s69
      %s71 = sshll.u32 [#allocation10], 4
      %s72 = int_to_ptr.vmem [resolvable:$true] %s71
      %77 = dma.hbm_to_vmem [thread:$0]  %s4, 1024, %s72, [#allocation9], 64, 64, 4
    $region21: #{tpu_custom_call.1} parent=1 // pred_fallthru
      _
    // Predicated region
    $region22: #{tpu_custom_call.1} parent=1 // pred_check
      _
    $region23: #{tpu_custom_call.1} parent=1 // pred_check_branch
      %79 = sbr.rel (0) target = $region25
    $region24: #{tpu_custom_call.1} parent=1 // pred_region
      _
    $region25: #{tpu_custom_call.1} parent=1 // pred_fallthru
      _
    // Predicated region
    $region26: #{tpu_custom_call.1} parent=1 // pred_check
      _
    $region27: #{tpu_custom_call.1} parent=1 // pred_check_branch
      %81 = sbr.rel (0) target = $region29
    $region28: #{tpu_custom_call.1} parent=1 // pred_region
      %82 = dma.done [#allocation3], 896
    $region29: #{tpu_custom_call.1} parent=1 // pred_fallthru
      _
    // Predicated region
    $region30: #{tpu_custom_call.1} parent=1 // pred_check
      _
    $region31: #{tpu_custom_call.1} parent=1 // pred_check_branch
      %84 = sbr.rel (0) target = $region33
    $region32: #{tpu_custom_call.1} parent=1 // pred_region
      %85 = dma.done [#allocation6], 1024
    $region33: #{tpu_custom_call.1} parent=1 // pred_fallthru
      _
    // Predicated region
    $region34: #{tpu_custom_call.1} parent=1 // pred_check
      _
    $region35: #{tpu_custom_call.1} parent=1 // pred_check_branch
      %87 = sbr.rel (0) target = $region37
    $region36: #{tpu_custom_call.1} parent=1 // pred_region
      %88 = dma.done [#allocation6], 1024
    $region37: #{tpu_custom_call.1} parent=1 // pred_fallthru
      _
    // Predicated region
    $region38: #{tpu_custom_call.1} parent=1 // pred_check
      _
    $region39: #{tpu_custom_call.1} parent=1 // pred_check_branch
      %90 = sbr.rel (0) target = $region41
    $region40: #{tpu_custom_call.1} parent=1 // pred_region
      %91 = dma.done [#allocation9], 1024
    $region41: #{tpu_custom_call.1} parent=1 // pred_fallthru
      _
    // Predicated region
    $region42: #{tpu_custom_call.1} parent=1 // pred_check
      _
    $region43: #{tpu_custom_call.1} parent=1 // pred_check_branch
      %93 = sbr.rel (0) target = $region45
    $region44: #{tpu_custom_call.1} parent=1 // pred_region
      %94 = dma.done [#allocation9], 1024
    $region45: #{tpu_custom_call.1} parent=1 // pred_fallthru
      _
    %v96 = vld [vmem:[%s5] sm:$0x1]
    %v97 = vld [vmem:[%s5 + $0x1] sm:$0x1]
    %v98 = vld [vmem:[%s5 + $0x2] sm:$0x1]
    %v99 = vld [vmem:[%s5 + $0x3] sm:$0x1]
    %v100 = vld [vmem:[#allocation2] sm:$0xff]
    %v101 = vld [vmem:[#allocation2 + $0x8] sm:$0xff]
    %v102 = vld [vmem:[#allocation2 + $0x10] sm:$0xff]
    %v103 = vld [vmem:[#allocation2 + $0x18] sm:$0xff]
    %v104 = vld [vmem:[#allocation2 + $0x20] sm:$0xff]
    %v105 = vld [vmem:[#allocation2 + $0x28] sm:$0xff]
    %v106 = vld [vmem:[#allocation2 + $0x30] sm:$0xff]
    %v107 = vpack.c.bf16 %v101, %v100
    %v108 = vpack.c.bf16 %v103, %v102
    %v109 = vpack.c.bf16 %v105, %v104
    %v110 = vpack.c.bf16 %v106, %v106
    %v111 = vld [vmem:[#allocation5] sm:$0xf]
    %v112 = vld [vmem:[#allocation5 + $0x4] sm:$0xf]
    %v113 = vld [vmem:[#allocation5 + $0x8] sm:$0xf]
    %v114 = vld [vmem:[#allocation5 + $0xc] sm:$0xf]
    %v115 = vld [vmem:[#allocation5 + $0x10] sm:$0xf]
    %v116 = vld [vmem:[#allocation5 + $0x14] sm:$0xf]
    %v117 = vld [vmem:[#allocation5 + $0x18] sm:$0xf]
    %v118 = vld [vmem:[#allocation5 + $0x1c] sm:$0xf]
    %v119 = vld [vmem:[#allocation5 + $0x20] sm:$0xf]
    %v120 = vld [vmem:[#allocation5 + $0x24] sm:$0xf]
    %v121 = vld [vmem:[#allocation5 + $0x28] sm:$0xf]
    %v122 = vld [vmem:[#allocation5 + $0x2c] sm:$0xf]
    %v123 = vld [vmem:[#allocation5 + $0x30] sm:$0xf]
    %v124 = vld [vmem:[#allocation5 + $0x34] sm:$0xf]
    %v125 = vld [vmem:[#allocation5 + $0x38] sm:$0xf]
    %v126 = vld [vmem:[#allocation5 + $0x3c] sm:$0xf]
    %v128 = vlaneseq
    %v129 = vshrl.u32 %v128, 7
    %v130 = vsub.s32 0, %v129
    %v131 = vrot.slane %v96, %v130
    %v149 = vunpack.c.l.b16 %v111
    %v150 = vunpack.c.l.b16 %v112
    %v151 = vunpack.c.l.b16 %v113
    %v152 = vunpack.c.l.b16 %v114
    %v153 = vunpack.c.l.b16 %v115
    %v154 = vunpack.c.l.b16 %v116
    %v155 = vunpack.c.l.b16 %v117
    %v156 = vunpack.c.l.b16 %v118
    %v157 = vunpack.c.l.b16 %v119
    %v158 = vunpack.c.l.b16 %v120
    %v159 = vunpack.c.l.b16 %v121
    %v160 = vunpack.c.l.b16 %v122
    %v161 = vunpack.c.l.b16 %v123
    %v162 = vunpack.c.l.b16 %v124
    %v163 = vunpack.c.l.b16 %v125
    %v164 = vunpack.c.l.b16 %v126
    %v165 = vpack.c.b16 %v150, %v149
    %v166 = vpack.c.b16 %v152, %v151
    %v167 = vpack.c.b16 %v154, %v153
    %v168 = vpack.c.b16 %v156, %v155
    %v169 = vpack.c.b16 %v158, %v157
    %v170 = vpack.c.b16 %v160, %v159
    %v171 = vpack.c.b16 %v162, %v161
    %v172 = vpack.c.b16 %v164, %v163
    %181 = vmatprep.subr.bf16.mxu0 0
    %182 = vmatpush1.bf16.msra.mxu0 %v165
    %183 = vmatprep.subr.bf16.mxu0 0
    %184 = vmatpush1.bf16.msra.mxu0 %v166
    %185 = vmatprep.subr.bf16.mxu0 0
    %186 = vmatpush1.bf16.msra.mxu0 %v167
    %187 = vmatprep.subr.bf16.mxu0 0
    %188 = vmatpush1.bf16.msra.mxu0 %v168
    %189 = vmatprep.subr.bf16.mxu0 0
    %190 = vmatpush1.bf16.msra.mxu0 %v169
    %191 = vmatprep.subr.bf16.mxu0 0
    %192 = vmatpush1.bf16.msra.mxu0 %v170
    %193 = vmatprep.subr.bf16.mxu0 0
    %194 = vmatpush1.bf16.msra.mxu0 %v171
    %195 = vmatprep.subr.bf16.mxu0 0
    %196 = vmatpush1.bf16.msra.mxu0 %v172
    %197 = vmatprep.subr.bf16.mxu0 0
    %198 = vmatpush1.bf16.msra.mxu0 0
    %199 = vmatprep.subr.bf16.mxu0 0
    %200 = vmatpush1.bf16.msra.mxu0 0
    %201 = vmatprep.subr.bf16.mxu0 0
    %202 = vmatpush1.bf16.msra.mxu0 0
    %203 = vmatprep.subr.bf16.mxu0 0
    %204 = vmatpush1.bf16.msra.mxu0 0
    %205 = vmatprep.subr.bf16.mxu0 0
    %206 = vmatpush1.bf16.msra.mxu0 0
    %207 = vmatprep.subr.bf16.mxu0 0
    %208 = vmatpush1.bf16.msra.mxu0 0
    %209 = vmatprep.subr.bf16.mxu0 0
    %210 = vmatpush1.bf16.msra.mxu0 0
    %211 = vmatprep.subr.bf16.mxu0 0
    %212 = vmatpush1.bf16.msra.mxu0 0
    %213 = vmatprep.mubr.bf16.mxu0 0
    %214 = vmatmul.mubr.bf16.gmra.mrb[0].mxu0 %v107
    %v215 = vpop.f32.mrb[0].mxu0
    %v216 = vadd.f32 %v131, %v215
    %v217 = vpop.f32.mrb[0].mxu0
    %v218 = vpop.f32.mrb[0].mxu0
    %v219 = vadd.f32 %v131, %v218
    %v220 = vpop.f32.mrb[0].mxu0
    %221 = vmatprep.mubr.bf16.mxu0 0
    %222 = vmatmul.mubr.bf16.gmra.mrb[0].mxu0 %v108
    %v223 = vpop.f32.mrb[0].mxu0
    %v224 = vadd.f32 %v131, %v223
    %v225 = vpop.f32.mrb[0].mxu0
    %v226 = vpop.f32.mrb[0].mxu0
    %v227 = vadd.f32 %v131, %v226
    %v228 = vpop.f32.mrb[0].mxu0
    %229 = vmatprep.mubr.bf16.mxu0 0
    %230 = vmatmul.mubr.bf16.gmra.mrb[0].mxu0 %v109
    %v231 = vpop.f32.mrb[0].mxu0
    %v232 = vadd.f32 %v131, %v231
    %v233 = vpop.f32.mrb[0].mxu0
    %v234 = vpop.f32.mrb[0].mxu0
    %v235 = vadd.f32 %v131, %v234
    %v236 = vpop.f32.mrb[0].mxu0
    %237 = vmatprep.mubr.bf16.mxu0 0
    %238 = vmatmul.mubr.bf16.gmra.mrb[0].mxu0 %v110
    %v239 = vpop.f32.mrb[0].mxu0
    %v240 = vadd.f32 %v131, %v239
    %v241 = vpop.f32.mrb[0].mxu0
    %v242 = vpop.f32.mrb[0].mxu0
    %v243 = vpop.f32.mrb[0].mxu0
    %244 = vdwg.mxu0
    %v245 = vtanh.pop %v216
    %v246 = vtanh.pop %v219
    %v247 = vtanh.pop %v224
    %v248 = vtanh.pop %v227
    %v249 = vtanh.pop %v232
    %v250 = vtanh.pop %v235
    %v251 = vtanh.pop %v240
    %v252 = vpack.c.bf16 %v246, %v245
    %v253 = vpack.c.bf16 %v248, %v247
    %v254 = vpack.c.bf16 %v250, %v249
    %v255 = vpack.c.bf16 %v251, %v251
    %v256 = vld [vmem:[#allocation7] sm:$0xf]
    %v257 = vld [vmem:[#allocation7 + $0x4] sm:$0xf]
    %v258 = vld [vmem:[#allocation7 + $0x8] sm:$0xf]
    %v259 = vld [vmem:[#allocation7 + $0xc] sm:$0xf]
    %v260 = vld [vmem:[#allocation7 + $0x10] sm:$0xf]
    %v261 = vld [vmem:[#allocation7 + $0x14] sm:$0xf]
    %v262 = vld [vmem:[#allocation7 + $0x18] sm:$0xf]
    %v263 = vld [vmem:[#allocation7 + $0x1c] sm:$0xf]
    %v264 = vld [vmem:[#allocation7 + $0x20] sm:$0xf]
    %v265 = vld [vmem:[#allocation7 + $0x24] sm:$0xf]
    %v266 = vld [vmem:[#allocation7 + $0x28] sm:$0xf]
    %v267 = vld [vmem:[#allocation7 + $0x2c] sm:$0xf]
    %v268 = vld [vmem:[#allocation7 + $0x30] sm:$0xf]
    %v269 = vld [vmem:[#allocation7 + $0x34] sm:$0xf]
    %v270 = vld [vmem:[#allocation7 + $0x38] sm:$0xf]
    %v271 = vld [vmem:[#allocation7 + $0x3c] sm:$0xf]
    %v273 = vlaneseq
    %v274 = vshrl.u32 %v273, 7
    %v275 = vsub.s32 0, %v274
    %v276 = vrot.slane %v97, %v275
    %v294 = vunpack.c.l.b16 %v256
    %v295 = vunpack.c.l.b16 %v257
    %v296 = vunpack.c.l.b16 %v258
    %v297 = vunpack.c.l.b16 %v259
    %v298 = vunpack.c.l.b16 %v260
    %v299 = vunpack.c.l.b16 %v261
    %v300 = vunpack.c.l.b16 %v262
    %v301 = vunpack.c.l.b16 %v263
    %v302 = vunpack.c.l.b16 %v264
    %v303 = vunpack.c.l.b16 %v265
    %v304 = vunpack.c.l.b16 %v266
    %v305 = vunpack.c.l.b16 %v267
    %v306 = vunpack.c.l.b16 %v268
    %v307 = vunpack.c.l.b16 %v269
    %v308 = vunpack.c.l.b16 %v270
    %v309 = vunpack.c.l.b16 %v271
    %v310 = vpack.c.b16 %v295, %v294
    %v311 = vpack.c.b16 %v297, %v296
    %v312 = vpack.c.b16 %v299, %v298
    %v313 = vpack.c.b16 %v301, %v300
    %v314 = vpack.c.b16 %v303, %v302
    %v315 = vpack.c.b16 %v305, %v304
    %v316 = vpack.c.b16 %v307, %v306
    %v317 = vpack.c.b16 %v309, %v308
    %326 = vmatprep.subr.bf16.mxu0 0
    %327 = vmatpush1.bf16.msra.mxu0 %v310
    %328 = vmatprep.subr.bf16.mxu0 0
    %329 = vmatpush1.bf16.msra.mxu0 %v311
    %330 = vmatprep.subr.bf16.mxu0 0
    %331 = vmatpush1.bf16.msra.mxu0 %v312
    %332 = vmatprep.subr.bf16.mxu0 0
    %333 = vmatpush1.bf16.msra.mxu0 %v313
    %334 = vmatprep.subr.bf16.mxu0 0
    %335 = vmatpush1.bf16.msra.mxu0 %v314
    %336 = vmatprep.subr.bf16.mxu0 0
    %337 = vmatpush1.bf16.msra.mxu0 %v315
    %338 = vmatprep.subr.bf16.mxu0 0
    %339 = vmatpush1.bf16.msra.mxu0 %v316
    %340 = vmatprep.subr.bf16.mxu0 0
    %341 = vmatpush1.bf16.msra.mxu0 %v317
    %342 = vmatprep.subr.bf16.mxu0 0
    %343 = vmatpush1.bf16.msra.mxu0 0
    %344 = vmatprep.subr.bf16.mxu0 0
    %345 = vmatpush1.bf16.msra.mxu0 0
    %346 = vmatprep.subr.bf16.mxu0 0
    %347 = vmatpush1.bf16.msra.mxu0 0
    %348 = vmatprep.subr.bf16.mxu0 0
    %349 = vmatpush1.bf16.msra.mxu0 0
    %350 = vmatprep.subr.bf16.mxu0 0
    %351 = vmatpush1.bf16.msra.mxu0 0
    %352 = vmatprep.subr.bf16.mxu0 0
    %353 = vmatpush1.bf16.msra.mxu0 0
    %354 = vmatprep.subr.bf16.mxu0 0
    %355 = vmatpush1.bf16.msra.mxu0 0
    %356 = vmatprep.subr.bf16.mxu0 0
    %357 = vmatpush1.bf16.msra.mxu0 0
    %358 = vmatprep.mubr.bf16.mxu0 0
    %359 = vmatmul.mubr.bf16.gmra.mrb[0].mxu0 %v252
    %v360 = vpop.f32.mrb[0].mxu0
    %v361 = vadd.f32 %v276, %v360
    %v362 = vpop.f32.mrb[0].mxu0
    %v363 = vpop.f32.mrb[0].mxu0
    %v364 = vadd.f32 %v276, %v363
    %v365 = vpop.f32.mrb[0].mxu0
    %366 = vmatprep.mubr.bf16.mxu0 0
    %367 = vmatmul.mubr.bf16.gmra.mrb[0].mxu0 %v253
    %v368 = vpop.f32.mrb[0].mxu0
    %v369 = vadd.f32 %v276, %v368
    %v370 = vpop.f32.mrb[0].mxu0
    %v371 = vpop.f32.mrb[0].mxu0
    %v372 = vadd.f32 %v276, %v371
    %v373 = vpop.f32.mrb[0].mxu0
    %374 = vmatprep.mubr.bf16.mxu0 0
    %375 = vmatmul.mubr.bf16.gmra.mrb[0].mxu0 %v254
    %v376 = vpop.f32.mrb[0].mxu0
    %v377 = vadd.f32 %v276, %v376
    %v378 = vpop.f32.mrb[0].mxu0
    %v379 = vpop.f32.mrb[0].mxu0
    %v380 = vadd.f32 %v276, %v379
    %v381 = vpop.f32.mrb[0].mxu0
    %382 = vmatprep.mubr.bf16.mxu0 0
    %383 = vmatmul.mubr.bf16.gmra.mrb[0].mxu0 %v255
    %v384 = vpop.f32.mrb[0].mxu0
    %v385 = vadd.f32 %v276, %v384
    %v386 = vpop.f32.mrb[0].mxu0
    %v387 = vpop.f32.mrb[0].mxu0
    %v388 = vpop.f32.mrb[0].mxu0
    %389 = vdwg.mxu0
    %v390 = vxor.u32 %v361, 2147483648
    %v391 = vxor.u32 %v364, 2147483648
    %v392 = vxor.u32 %v369, 2147483648
    %v393 = vxor.u32 %v372, 2147483648
    %v394 = vxor.u32 %v377, 2147483648
    %v395 = vxor.u32 %v380, 2147483648
    %v396 = vxor.u32 %v385, 2147483648
    %v397 = vmul.f32 %v390, 1.442695
    %v398 = vpow.pop %v397
    %v399 = vmul.f32 %v391, 1.442695
    %v400 = vpow.pop %v399
    %v401 = vmul.f32 %v392, 1.442695
    %v402 = vpow.pop %v401
    %v403 = vmul.f32 %v393, 1.442695
    %v404 = vpow.pop %v403
    %v405 = vmul.f32 %v394, 1.442695
    %v406 = vpow.pop %v405
    %v407 = vmul.f32 %v395, 1.442695
    %v408 = vpow.pop %v407
    %v409 = vmul.f32 %v396, 1.442695
    %v410 = vpow.pop %v409
    %v411 = vadd.f32 %v398, 1.0
    %v412 = vadd.f32 %v400, 1.0
    %v413 = vadd.f32 %v402, 1.0
    %v414 = vadd.f32 %v404, 1.0
    %v415 = vadd.f32 %v406, 1.0
    %v416 = vadd.f32 %v408, 1.0
    %v417 = vadd.f32 %v410, 1.0
    %v418 = vrcp.pop %v411
    %v419 = vmul.f32 1.0, %v418
    %v420 = vrcp.pop %v412
    %v421 = vmul.f32 1.0, %v420
    %v422 = vrcp.pop %v413
    %v423 = vmul.f32 1.0, %v422
    %v424 = vrcp.pop %v414
    %v425 = vmul.f32 1.0, %v424
    %v426 = vrcp.pop %v415
    %v427 = vmul.f32 1.0, %v426
    %v428 = vrcp.pop %v416
    %v429 = vmul.f32 1.0, %v428
    %v430 = vrcp.pop %v417
    %v431 = vmul.f32 1.0, %v430
    %v432 = vmul.f32 %v100, %v419
    %v433 = vmul.f32 %v101, %v421
    %v434 = vmul.f32 %v102, %v423
    %v435 = vmul.f32 %v103, %v425
    %v436 = vmul.f32 %v104, %v427
    %v437 = vmul.f32 %v105, %v429
    %v438 = vmul.f32 %v106, %v431
    %v439 = vpack.c.bf16 %v433, %v432
    %v440 = vpack.c.bf16 %v435, %v434
    %v441 = vpack.c.bf16 %v437, %v436
    %v442 = vpack.c.bf16 %v438, %v438
    %v443 = vld [vmem:[#allocation8] sm:$0xf]
    %v444 = vld [vmem:[#allocation8 + $0x4] sm:$0xf]
    %v445 = vld [vmem:[#allocation8 + $0x8] sm:$0xf]
    %v446 = vld [vmem:[#allocation8 + $0xc] sm:$0xf]
    %v447 = vld [vmem:[#allocation8 + $0x10] sm:$0xf]
    %v448 = vld [vmem:[#allocation8 + $0x14] sm:$0xf]
    %v449 = vld [vmem:[#allocation8 + $0x18] sm:$0xf]
    %v450 = vld [vmem:[#allocation8 + $0x1c] sm:$0xf]
    %v451 = vld [vmem:[#allocation8 + $0x20] sm:$0xf]
    %v452 = vld [vmem:[#allocation8 + $0x24] sm:$0xf]
    %v453 = vld [vmem:[#allocation8 + $0x28] sm:$0xf]
    %v454 = vld [vmem:[#allocation8 + $0x2c] sm:$0xf]
    %v455 = vld [vmem:[#allocation8 + $0x30] sm:$0xf]
    %v456 = vld [vmem:[#allocation8 + $0x34] sm:$0xf]
    %v457 = vld [vmem:[#allocation8 + $0x38] sm:$0xf]
    %v458 = vld [vmem:[#allocation8 + $0x3c] sm:$0xf]
    %v460 = vlaneseq
    %v461 = vshrl.u32 %v460, 7
    %v462 = vsub.s32 0, %v461
    %v463 = vrot.slane %v98, %v462
    %v481 = vunpack.c.l.b16 %v443
    %v482 = vunpack.c.l.b16 %v444
    %v483 = vunpack.c.l.b16 %v445
    %v484 = vunpack.c.l.b16 %v446
    %v485 = vunpack.c.l.b16 %v447
    %v486 = vunpack.c.l.b16 %v448
    %v487 = vunpack.c.l.b16 %v449
    %v488 = vunpack.c.l.b16 %v450
    %v489 = vunpack.c.l.b16 %v451
    %v490 = vunpack.c.l.b16 %v452
    %v491 = vunpack.c.l.b16 %v453
    %v492 = vunpack.c.l.b16 %v454
    %v493 = vunpack.c.l.b16 %v455
    %v494 = vunpack.c.l.b16 %v456
    %v495 = vunpack.c.l.b16 %v457
    %v496 = vunpack.c.l.b16 %v458
    %v497 = vpack.c.b16 %v482, %v481
    %v498 = vpack.c.b16 %v484, %v483
    %v499 = vpack.c.b16 %v486, %v485
    %v500 = vpack.c.b16 %v488, %v487
    %v501 = vpack.c.b16 %v490, %v489
    %v502 = vpack.c.b16 %v492, %v491
    %v503 = vpack.c.b16 %v494, %v493
    %v504 = vpack.c.b16 %v496, %v495
    %513 = vmatprep.subr.bf16.mxu0 0
    %514 = vmatpush1.bf16.msra.mxu0 %v497
    %515 = vmatprep.subr.bf16.mxu0 0
    %516 = vmatpush1.bf16.msra.mxu0 %v498
    %517 = vmatprep.subr.bf16.mxu0 0
    %518 = vmatpush1.bf16.msra.mxu0 %v499
    %519 = vmatprep.subr.bf16.mxu0 0
    %520 = vmatpush1.bf16.msra.mxu0 %v500
    %521 = vmatprep.subr.bf16.mxu0 0
    %522 = vmatpush1.bf16.msra.mxu0 %v501
    %523 = vmatprep.subr.bf16.mxu0 0
    %524 = vmatpush1.bf16.msra.mxu0 %v502
    %525 = vmatprep.subr.bf16.mxu0 0
    %526 = vmatpush1.bf16.msra.mxu0 %v503
    %527 = vmatprep.subr.bf16.mxu0 0
    %528 = vmatpush1.bf16.msra.mxu0 %v504
    %529 = vmatprep.subr.bf16.mxu0 0
    %530 = vmatpush1.bf16.msra.mxu0 0
    %531 = vmatprep.subr.bf16.mxu0 0
    %532 = vmatpush1.bf16.msra.mxu0 0
    %533 = vmatprep.subr.bf16.mxu0 0
    %534 = vmatpush1.bf16.msra.mxu0 0
    %535 = vmatprep.subr.bf16.mxu0 0
    %536 = vmatpush1.bf16.msra.mxu0 0
    %537 = vmatprep.subr.bf16.mxu0 0
    %538 = vmatpush1.bf16.msra.mxu0 0
    %539 = vmatprep.subr.bf16.mxu0 0
    %540 = vmatpush1.bf16.msra.mxu0 0
    %541 = vmatprep.subr.bf16.mxu0 0
    %542 = vmatpush1.bf16.msra.mxu0 0
    %543 = vmatprep.subr.bf16.mxu0 0
    %544 = vmatpush1.bf16.msra.mxu0 0
    %545 = vmatprep.mubr.bf16.mxu0 0
    %546 = vmatmul.mubr.bf16.gmra.mrb[0].mxu0 %v439
    %v547 = vpop.f32.mrb[0].mxu0
    %v548 = vadd.f32 %v463, %v547
    %v549 = vpop.f32.mrb[0].mxu0
    %v550 = vpop.f32.mrb[0].mxu0
    %v551 = vadd.f32 %v463, %v550
    %v552 = vpop.f32.mrb[0].mxu0
    %553 = vmatprep.mubr.bf16.mxu0 0
    %554 = vmatmul.mubr.bf16.gmra.mrb[0].mxu0 %v440
    %v555 = vpop.f32.mrb[0].mxu0
    %v556 = vadd.f32 %v463, %v555
    %v557 = vpop.f32.mrb[0].mxu0
    %v558 = vpop.f32.mrb[0].mxu0
    %v559 = vadd.f32 %v463, %v558
    %v560 = vpop.f32.mrb[0].mxu0
    %561 = vmatprep.mubr.bf16.mxu0 0
    %562 = vmatmul.mubr.bf16.gmra.mrb[0].mxu0 %v441
    %v563 = vpop.f32.mrb[0].mxu0
    %v564 = vadd.f32 %v463, %v563
    %v565 = vpop.f32.mrb[0].mxu0
    %v566 = vpop.f32.mrb[0].mxu0
    %v567 = vadd.f32 %v463, %v566
    %v568 = vpop.f32.mrb[0].mxu0
    %569 = vmatprep.mubr.bf16.mxu0 0
    %570 = vmatmul.mubr.bf16.gmra.mrb[0].mxu0 %v442
    %v571 = vpop.f32.mrb[0].mxu0
    %v572 = vadd.f32 %v463, %v571
    %v573 = vpop.f32.mrb[0].mxu0
    %v574 = vpop.f32.mrb[0].mxu0
    %v575 = vpop.f32.mrb[0].mxu0
    %576 = vdwg.mxu0
    %v577 = vmax.f32 %v548, 0.0
    %v578 = vmax.f32 %v551, 0.0
    %v579 = vmax.f32 %v556, 0.0
    %v580 = vmax.f32 %v559, 0.0
    %v581 = vmax.f32 %v564, 0.0
    %v582 = vmax.f32 %v567, 0.0
    %v583 = vmax.f32 %v572, 0.0
    %v584 = vpack.c.bf16 %v578, %v577
    %v585 = vpack.c.bf16 %v580, %v579
    %v586 = vpack.c.bf16 %v582, %v581
    %v587 = vpack.c.bf16 %v583, %v583
    %v588 = vld [vmem:[#allocation10] sm:$0xf]
    %v589 = vld [vmem:[#allocation10 + $0x4] sm:$0xf]
    %v590 = vld [vmem:[#allocation10 + $0x8] sm:$0xf]
    %v591 = vld [vmem:[#allocation10 + $0xc] sm:$0xf]
    %v592 = vld [vmem:[#allocation10 + $0x10] sm:$0xf]
    %v593 = vld [vmem:[#allocation10 + $0x14] sm:$0xf]
    %v594 = vld [vmem:[#allocation10 + $0x18] sm:$0xf]
    %v595 = vld [vmem:[#allocation10 + $0x1c] sm:$0xf]
    %v596 = vld [vmem:[#allocation10 + $0x20] sm:$0xf]
    %v597 = vld [vmem:[#allocation10 + $0x24] sm:$0xf]
    %v598 = vld [vmem:[#allocation10 + $0x28] sm:$0xf]
    %v599 = vld [vmem:[#allocation10 + $0x2c] sm:$0xf]
    %v600 = vld [vmem:[#allocation10 + $0x30] sm:$0xf]
    %v601 = vld [vmem:[#allocation10 + $0x34] sm:$0xf]
    %v602 = vld [vmem:[#allocation10 + $0x38] sm:$0xf]
    %v603 = vld [vmem:[#allocation10 + $0x3c] sm:$0xf]
    %v605 = vlaneseq
    %v606 = vshrl.u32 %v605, 7
    %v607 = vsub.s32 0, %v606
    %v608 = vrot.slane %v99, %v607
    %v626 = vunpack.c.l.b16 %v588
    %v627 = vunpack.c.l.b16 %v589
    %v628 = vunpack.c.l.b16 %v590
    %v629 = vunpack.c.l.b16 %v591
    %v630 = vunpack.c.l.b16 %v592
    %v631 = vunpack.c.l.b16 %v593
    %v632 = vunpack.c.l.b16 %v594
    %v633 = vunpack.c.l.b16 %v595
    %v634 = vunpack.c.l.b16 %v596
    %v635 = vunpack.c.l.b16 %v597
    %v636 = vunpack.c.l.b16 %v598
    %v637 = vunpack.c.l.b16 %v599
    %v638 = vunpack.c.l.b16 %v600
    %v639 = vunpack.c.l.b16 %v601
    %v640 = vunpack.c.l.b16 %v602
    %v641 = vunpack.c.l.b16 %v603
    %v642 = vpack.c.b16 %v627, %v626
    %v643 = vpack.c.b16 %v629, %v628
    %v644 = vpack.c.b16 %v631, %v630
    %v645 = vpack.c.b16 %v633, %v632
    %v646 = vpack.c.b16 %v635, %v634
    %v647 = vpack.c.b16 %v637, %v636
    %v648 = vpack.c.b16 %v639, %v638
    %v649 = vpack.c.b16 %v641, %v640
    %658 = vmatprep.subr.bf16.mxu0 0
    %659 = vmatpush1.bf16.msra.mxu0 %v642
    %660 = vmatprep.subr.bf16.mxu0 0
    %661 = vmatpush1.bf16.msra.mxu0 %v643
    %662 = vmatprep.subr.bf16.mxu0 0
    %663 = vmatpush1.bf16.msra.mxu0 %v644
    %664 = vmatprep.subr.bf16.mxu0 0
    %665 = vmatpush1.bf16.msra.mxu0 %v645
    %666 = vmatprep.subr.bf16.mxu0 0
    %667 = vmatpush1.bf16.msra.mxu0 %v646
    %668 = vmatprep.subr.bf16.mxu0 0
    %669 = vmatpush1.bf16.msra.mxu0 %v647
    %670 = vmatprep.subr.bf16.mxu0 0
    %671 = vmatpush1.bf16.msra.mxu0 %v648
    %672 = vmatprep.subr.bf16.mxu0 0
    %673 = vmatpush1.bf16.msra.mxu0 %v649
    %674 = vmatprep.subr.bf16.mxu0 0
    %675 = vmatpush1.bf16.msra.mxu0 0
    %676 = vmatprep.subr.bf16.mxu0 0
    %677 = vmatpush1.bf16.msra.mxu0 0
    %678 = vmatprep.subr.bf16.mxu0 0
    %679 = vmatpush1.bf16.msra.mxu0 0
    %680 = vmatprep.subr.bf16.mxu0 0
    %681 = vmatpush1.bf16.msra.mxu0 0
    %682 = vmatprep.subr.bf16.mxu0 0
    %683 = vmatpush1.bf16.msra.mxu0 0
    %684 = vmatprep.subr.bf16.mxu0 0
    %685 = vmatpush1.bf16.msra.mxu0 0
    %686 = vmatprep.subr.bf16.mxu0 0
    %687 = vmatpush1.bf16.msra.mxu0 0
    %688 = vmatprep.subr.bf16.mxu0 0
    %689 = vmatpush1.bf16.msra.mxu0 0
    %690 = vmatprep.mubr.bf16.mxu0 0
    %691 = vmatmul.mubr.bf16.gmra.mrb[0].mxu0 %v584
    %v692 = vpop.f32.mrb[0].mxu0
    %v693 = vadd.f32 %v608, %v692
    %v694 = vpop.f32.mrb[0].mxu0
    %v695 = vpop.f32.mrb[0].mxu0
    %v696 = vadd.f32 %v608, %v695
    %v697 = vpop.f32.mrb[0].mxu0
    %698 = vmatprep.mubr.bf16.mxu0 0
    %699 = vmatmul.mubr.bf16.gmra.mrb[0].mxu0 %v585
    %v700 = vpop.f32.mrb[0].mxu0
    %v701 = vadd.f32 %v608, %v700
    %v702 = vpop.f32.mrb[0].mxu0
    %v703 = vpop.f32.mrb[0].mxu0
    %v704 = vadd.f32 %v608, %v703
    %v705 = vpop.f32.mrb[0].mxu0
    %706 = vmatprep.mubr.bf16.mxu0 0
    %707 = vmatmul.mubr.bf16.gmra.mrb[0].mxu0 %v586
    %v708 = vpop.f32.mrb[0].mxu0
    %v709 = vadd.f32 %v608, %v708
    %v710 = vpop.f32.mrb[0].mxu0
    %v711 = vpop.f32.mrb[0].mxu0
    %v712 = vadd.f32 %v608, %v711
    %v713 = vpop.f32.mrb[0].mxu0
    %714 = vmatprep.mubr.bf16.mxu0 0
    %715 = vmatmul.mubr.bf16.gmra.mrb[0].mxu0 %v587
    %v716 = vpop.f32.mrb[0].mxu0
    %v717 = vadd.f32 %v608, %v716
    %v718 = vpop.f32.mrb[0].mxu0
    %v719 = vpop.f32.mrb[0].mxu0
    %v720 = vpop.f32.mrb[0].mxu0
    %721 = vdwg.mxu0
    %722 = vst [vmem:[#allocation11] sm:$0xff] %v693
    %723 = vst [vmem:[#allocation11 + $0x8] sm:$0xff] %v696
    %724 = vst [vmem:[#allocation11 + $0x10] sm:$0xff] %v701
    %725 = vst [vmem:[#allocation11 + $0x18] sm:$0xff] %v704
    %726 = vst [vmem:[#allocation11 + $0x20] sm:$0xff] %v709
    %727 = vst [vmem:[#allocation11 + $0x28] sm:$0xff] %v712
    %728 = vst [vmem:[#allocation11 + $0x30] sm:$0xff] %v717
    %729 = vst [vmem:[#allocation12] sm:$0xff] %v419
    %730 = vst [vmem:[#allocation12 + $0x8] sm:$0xff] %v421
    %731 = vst [vmem:[#allocation12 + $0x10] sm:$0xff] %v423
    %732 = vst [vmem:[#allocation12 + $0x18] sm:$0xff] %v425
    %733 = vst [vmem:[#allocation12 + $0x20] sm:$0xff] %v427
    %734 = vst [vmem:[#allocation12 + $0x28] sm:$0xff] %v429
    %735 = vst [vmem:[#allocation12 + $0x30] sm:$0xff] %v431
    // Predicated region
    $region46: #{tpu_custom_call.1} parent=1 // pred_check
      _
    $region47: #{tpu_custom_call.1} parent=1 // pred_check_branch
      %737 = sbr.rel (0) target = $region49
    $region48: #{tpu_custom_call.1} parent=1 // pred_region
      %s739 = ssub.s32 896, 896
      %740 = vsyncadd [#allocation4], %s739
      %s741 = sshll.u32 [#allocation11], 4
      %s742 = int_to_ptr.vmem [resolvable:$true] %s741
      %747 = dma.vmem_to_hbm [thread:$0]  %s742, 896, %s6, [#allocation4], 128, 128, 8
    $region49: #{tpu_custom_call.1} parent=1 // pred_fallthru
      _
    // Predicated region
    $region50: #{tpu_custom_call.1} parent=1 // pred_check
      _
    $region51: #{tpu_custom_call.1} parent=1 // pred_check_branch
      %749 = sbr.rel (0) target = $region53
    $region52: #{tpu_custom_call.1} parent=1 // pred_region
      %s751 = ssub.s32 896, 896
      %752 = vsyncadd [#allocation13], %s751
      %s753 = sshll.u32 [#allocation12], 4
      %s754 = int_to_ptr.vmem [resolvable:$true] %s753
      %759 = dma.vmem_to_hbm [thread:$0]  %s754, 896, %s7, [#allocation13], 128, 128, 8
    $region53: #{tpu_custom_call.1} parent=1 // pred_fallthru
      _
    // Predicated region
    $region54: #{tpu_custom_call.1} parent=1 // pred_check
      _
    $region55: #{tpu_custom_call.1} parent=1 // pred_check_branch
      %761 = sbr.rel (0) target = $region57
    $region56: #{tpu_custom_call.1} parent=1 // pred_region
      %762 = dma.done [#allocation4], 896
    $region57: #{tpu_custom_call.1} parent=1 // pred_fallthru
      _
    // Predicated region
    $region58: #{tpu_custom_call.1} parent=1 // pred_check
      _
    $region59: #{tpu_custom_call.1} parent=1 // pred_check_branch
      %764 = sbr.rel (0) target = $region61
    $region60: #{tpu_custom_call.1} parent=1 // pred_region
      %765 = dma.done [#allocation13], 896
    $region61: #{tpu_custom_call.1} parent=1 // pred_fallthru
      _
    %766 = vsyncpa [#allocation3], 1
    %767 = vsyncpa [#allocation6], 1
    %768 = vsyncpa [#allocation9], 1
    %769 = vsyncpa [#allocation4], 1
    %770 = vsyncpa [#allocation13], 1

</llo_original>
